<compile_context>
chip_gen: v6e
topology: v6e:2x2x1
jax: 0.10.0
libtpu: 0.0.40
codegen_flags: <defaults>
</compile_context>

<pallas_src>
import functools
import math

import jax
import jax.numpy as jnp
from jax import lax
from jax.experimental import pallas as pl
from jax.experimental.pallas import tpu as pltpu


def _proj_layernorm_kernel(x_ref, w_ref, b_ref, g_ref, beta_ref, o_ref, *, eps):
    # x_ref:    (tm, Kp)    im2col patch rows (bf16 or f32)
    # w_ref:    (Kp, D)     flattened conv weight (transposed, possibly zero-padded)
    # b_ref:    (1, D)      conv bias (f32)
    # g_ref:    (1, D)      LayerNorm gamma (f32)
    # beta_ref: (1, D)      LayerNorm beta (f32)
    # o_ref:    (tm, D)     output tokens
    acc = jnp.dot(x_ref[...], w_ref[...], preferred_element_type=jnp.float32)
    acc = acc + b_ref[...].astype(jnp.float32)

    # Single-pass LayerNorm statistics: mean = E[x], var = E[x^2] - mean^2 (all f32).
    inv_d = 1.0 / acc.shape[-1]
    s = jnp.sum(acc, axis=-1, keepdims=True)
    ss = jnp.sum(acc * acc, axis=-1, keepdims=True)
    mean = s * inv_d
    var = jnp.maximum(ss * inv_d - mean * mean, 0.0)   # guard tiny cancellation
    inv = lax.rsqrt(var + eps)

    y = (acc - mean) * inv * g_ref[...].astype(jnp.float32) \
        + beta_ref[...].astype(jnp.float32)
    o_ref[...] = y.astype(o_ref.dtype)


def _pick_tuning(tm_request):
    """Row-tile size + VMEM limit derived from the detected chip (safe fallbacks)."""
    cap = 0
    try:
        cap = int(getattr(pltpu.get_tpu_info(), "vmem_capacity_bytes", 0) or 0)
    except Exception:
        cap = 0
    if cap <= 0:
        cap = 64 * 1024 * 1024                       # conservative: v7x per-TC VMEM
    vmem_limit = int(min(cap * 3 // 4, 100 * 1024 * 1024))
    vmem_limit = max(vmem_limit, 32 * 1024 * 1024)
    if tm_request is None:
        # v5e/v6e (128 MiB VMEM): bigger row tiles; v7x (64 MiB per TC): keep <= 1024.
        tm_request = 2048 if cap >= 100 * 1024 * 1024 else 1024
    return tm_request, vmem_limit


def overlap_patch_embed_pallas(x_nchw, conv_w, conv_b, ln_gamma, ln_beta, *,
                               patch_size=7, stride=4, eps=1e-5, tm=None,
                               compute_dtype=jnp.bfloat16, out_dtype=None):
    """Forward of OverlapPatchEmbed. Returns (tokens (N, H*W, D), H, W)."""
    N, C_in, H, W = x_nchw.shape
    D = conv_w.shape[0]
    K = patch_size
    P = K // 2
    H_out = (H + 2 * P - K) // stride + 1
    W_out = (W + 2 * P - K) // stride + 1
    Kdim = C_in * K * K
    M = N * H_out * W_out
    out_dtype = x_nchw.dtype if out_dtype is None else out_dtype

    # ---- wrapper glue: im2col in NHWC (no 5-D transpose of the big buffer).
    # feature order = (c, kh, kw) to match conv_w.reshape(D, -1); row order =
    # (n, h_out, w_out) = token order, so the kernel output IS the module output.
    # TODO(synk): pull the patch gather into the kernel (manual halo DMA of padded
    # NHWC rows via memory_space=pl.ANY) to drop the im2col HBM round-trip entirely.
    x_nhwc = jnp.transpose(x_nchw, (0, 2, 3, 1))                # (N, H, W, C) - small
    x_p = jnp.pad(x_nhwc, ((0, 0), (P, P), (P, P), (0, 0)))
    cols = []
    for kh in range(K):
        for kw in range(K):
            cols.append(lax.slice(
                x_p,
                (0, kh, kw, 0),
                (N,
                 kh + (H_out - 1) * stride + 1,
                 kw + (W_out - 1) * stride + 1,
                 C_in),
                (1, stride, stride, 1)))             # each: (N, H_out, W_out, C_in)
    patches = jnp.stack(cols, axis=-1)               # (N, H_out, W_out, C_in, K*K)
    patches = patches.reshape(M, Kdim).astype(compute_dtype)
    w2d = conv_w.reshape(D, Kdim).T.astype(compute_dtype)       # (Kdim, D)

    # Zero-pad the feature axis to a multiple of 128 only for sub-4-byte dtypes
    # (lane-aligned patch rows + full-K MXU passes; padding in f32 would only add
    # HBM traffic to a mem-bound kernel).
    Kp = Kdim
    if jnp.dtype(compute_dtype).itemsize < 4:
        Kp = ((Kdim + 127) // 128) * 128
    if Kp != Kdim:
        patches = jnp.pad(patches, ((0, 0), (0, Kp - Kdim)))
        w2d = jnp.pad(w2d, ((0, Kp - Kdim), (0, 0)))

    b2d = conv_b.reshape(1, D).astype(jnp.float32)
    g2d = ln_gamma.reshape(1, D).astype(jnp.float32)
    beta2d = ln_beta.reshape(1, D).astype(jnp.float32)

    # Big row tile (multiple of 8), clamped so tiny problems get a single block.
    # No explicit pad of M: Pallas masks the ragged last block's writes, and the
    # LayerNorm is strictly per-row so garbage rows never leak into valid outputs.
    tm, vmem_limit = _pick_tuning(tm)
    tm = max(8, min(((tm + 7) // 8) * 8, ((M + 7) // 8) * 8))
    grid = (pl.cdiv(M, tm),)

    kernel = functools.partial(_proj_layernorm_kernel, eps=eps)
    # TODO(synk): mark the constant-index-map operands (w2d, b2d, g2d, beta2d) with
    # pipeline_mode=pl.Buffered(1) once single-buffering is verified on this jax
    # version (saves ~0.5-1 MiB VMEM + per-step DMA descriptor work).
    # TODO(synk): for embed_dim < 128 the out block is not lane-dense; fold 128/D
    # token rows into the lane axis on the wrapper side for such configs.
    out = pl.pallas_call(
        kernel,
        out_shape=jax.ShapeDtypeStruct((M, D), out_dtype),
        grid_spec=pltpu.PrefetchScalarGridSpec(
            num_scalar_prefetch=0,
            grid=grid,
            in_specs=[
                pl.BlockSpec((tm, Kp), lambda i: (i, 0)),    # patch rows
                pl.BlockSpec((Kp, D), lambda i: (0, 0)),     # weight (resident)
                pl.BlockSpec((1, D), lambda i: (0, 0)),      # conv bias
                pl.BlockSpec((1, D), lambda i: (0, 0)),      # LN gamma
                pl.BlockSpec((1, D), lambda i: (0, 0)),      # LN beta
            ],
            out_specs=pl.BlockSpec((tm, D), lambda i: (i, 0)),
        ),
        compiler_params=pltpu.CompilerParams(
            # TODO(synk): on v7x verify the row grid genuinely shards across the
            # 2 TensorCores (plain "parallel" may run on one TC; CORE_PARALLEL /
            # pl.core_map would guarantee it).
            dimension_semantics=("parallel",),
            vmem_limit_bytes=vmem_limit,
        ),
    )(patches, w2d, b2d, g2d, beta2d)

    return out.reshape(N, H_out * W_out, D), H_out, W_out


if __name__ == "__main__":
    key = jax.random.PRNGKey(0)
    k1, k2, k3, k4, k5 = jax.random.split(key, 5)

    # Small shapes consistent with the module: batch=2, in_chans=3, 16x16 image,
    # patch_size=7, stride=4, embed_dim=32.
    N, C_in, H, W = 2, 3, 16, 16
    K, S, D = 7, 4, 32
    eps = 1e-5

    x = jax.random.normal(k1, (N, C_in, H, W), dtype=jnp.float32)
    fan_out = K * K * D
    conv_w = jax.random.normal(k2, (D, C_in, K, K), jnp.float32) * math.sqrt(2.0 / fan_out)
    conv_b = 0.1 * jax.random.normal(k3, (D,), jnp.float32)
    gamma = 1.0 + 0.1 * jax.random.normal(k4, (D,), jnp.float32)
    beta = 0.1 * jax.random.normal(k5, (D,), jnp.float32)

    # Pure-JAX reference: Conv2d -> flatten(2).transpose(1,2) -> LayerNorm (f32).
    conv = lax.conv_general_dilated(
        x, conv_w, (S, S), ((K // 2, K // 2), (K // 2, K // 2)),
        dimension_numbers=("NCHW", "OIHW", "NCHW"),
        precision=lax.Precision.HIGHEST)
    conv = conv + conv_b.reshape(1, D, 1, 1)
    Ho_ref, Wo_ref = conv.shape[2], conv.shape[3]
    ref = conv.reshape(N, D, Ho_ref * Wo_ref).transpose(0, 2, 1)
    mu = ref.mean(-1, keepdims=True)
    var = ((ref - mu) ** 2).mean(-1, keepdims=True)
    ref = (ref - mu) * lax.rsqrt(var + eps) * gamma + beta

    # 1) f32 compute path (unpadded Kdim): check against the reference.
    tok32, Ho, Wo = overlap_patch_embed_pallas(
        x, conv_w, conv_b, gamma, beta, patch_size=K, stride=S, eps=eps,
        compute_dtype=jnp.float32)
    tok32 = jax.block_until_ready(tok32)
    assert (Ho, Wo) == (4, 4), (Ho, Wo)
    assert (Ho_ref, Wo_ref) == (Ho, Wo), (Ho_ref, Wo_ref)
    assert tok32.shape == (N, Ho * Wo, D), tok32.shape
    err32 = float(jnp.max(jnp.abs(tok32 - ref)))
    assert jnp.allclose(tok32, ref, atol=2e-2, rtol=2e-2), err32

    # 2) Default low-HBM-traffic path: bf16 patches/weights/output, f32 accumulation.
    #    Looser tolerance per the mixed-precision contract.
    tokbf, Ho2, Wo2 = overlap_patch_embed_pallas(
        x, conv_w, conv_b, gamma, beta, patch_size=K, stride=S, eps=eps,
        compute_dtype=jnp.bfloat16, out_dtype=jnp.bfloat16)
    tokbf = jax.block_until_ready(tokbf).astype(jnp.float32)
    assert (Ho2, Wo2) == (Ho, Wo), (Ho2, Wo2)
    assert tokbf.shape == (N, Ho * Wo, D), tokbf.shape
    errbf = float(jnp.max(jnp.abs(tokbf - ref)))
    assert jnp.allclose(tokbf, ref, atol=5e-2, rtol=5e-2), errbf

    print("KERNEL_OK")
</pallas_src>

<mosaic_0001>
module attributes {stable_mosaic.version = 11 : i64} {
  func.func @_proj_layernorm_kernel(%arg0: i32, %arg1: memref<32x147xf32, #tpu.memory_space<vmem>>, %arg2: memref<147x32xf32, #tpu.memory_space<vmem>>, %arg3: memref<1x32xf32, #tpu.memory_space<vmem>>, %arg4: memref<1x32xf32, #tpu.memory_space<vmem>>, %arg5: memref<1x32xf32, #tpu.memory_space<vmem>>, %arg6: memref<32x32xf32, #tpu.memory_space<vmem>>) attributes {dimension_semantics = [#tpu.dimension_semantics<parallel>], iteration_bounds = array<i64: 1>, scalar_prefetch = 0 : i64, scratch_operands = 0 : i64, tpu.core_type = #tpu.core_type<tc>, window_params = [{transform_indices = @transform_0, window_bounds = array<i64: 32, 147>}, {pipeline_mode = #tpu.pipeline_mode<synchronous>, transform_indices = @transform_1, window_bounds = array<i64: 147, 32>}, {pipeline_mode = #tpu.pipeline_mode<synchronous>, transform_indices = @transform_2, window_bounds = array<i64: 1, 32>}, {pipeline_mode = #tpu.pipeline_mode<synchronous>, transform_indices = @transform_3, window_bounds = array<i64: 1, 32>}, {pipeline_mode = #tpu.pipeline_mode<synchronous>, transform_indices = @transform_4, window_bounds = array<i64: 1, 32>}, {transform_indices = @transform_5, window_bounds = array<i64: 32, 32>}]} {
    %c0 = arith.constant 0 : index
    %c0_0 = arith.constant 0 : index
    %0 = vector.load %arg1[%c0, %c0_0] : memref<32x147xf32, #tpu.memory_space<vmem>>, vector<32x147xf32>
    %c0_1 = arith.constant 0 : index
    %c0_2 = arith.constant 0 : index
    %1 = vector.load %arg2[%c0_1, %c0_2] : memref<147x32xf32, #tpu.memory_space<vmem>>, vector<147x32xf32>
    %cst = arith.constant dense<0.000000e+00> : vector<32x32xf32>
    %2 = tpu.matmul %0, %1, %cst {dimension_numbers = #tpu.dot_dimension_numbers<[1], [0], [0], [1], [0, 0, 1, 1], [], []>} : vector<32x147xf32>, vector<147x32xf32>, vector<32x32xf32> -> vector<32x32xf32>
    %c0_3 = arith.constant 0 : index
    %c0_4 = arith.constant 0 : index
    %3 = vector.load %arg3[%c0_3, %c0_4] : memref<1x32xf32, #tpu.memory_space<vmem>>, vector<1x32xf32>
    %4 = vector.broadcast %3 : vector<1x32xf32> to vector<32x32xf32>
    %5 = arith.addf %2, %4 : vector<32x32xf32>
    %cst_5 = arith.constant dense<0.000000e+00> : vector<32xf32>
    %6 = vector.multi_reduction <add>, %5, %cst_5 [1] : vector<32x32xf32> to vector<32xf32>
    %7 = vector.shape_cast %6 : vector<32xf32> to vector<32x1xf32>
    %8 = arith.mulf %5, %5 : vector<32x32xf32>
    %cst_6 = arith.constant dense<0.000000e+00> : vector<32xf32>
    %9 = vector.multi_reduction <add>, %8, %cst_6 [1] : vector<32x32xf32> to vector<32xf32>
    %10 = vector.shape_cast %9 : vector<32xf32> to vector<32x1xf32>
    %cst_7 = arith.constant 3.125000e-02 : f32
    %11 = vector.broadcast %cst_7 : f32 to vector<32x1xf32>
    %12 = arith.mulf %7, %11 : vector<32x1xf32>
    %cst_8 = arith.constant 3.125000e-02 : f32
    %13 = vector.broadcast %cst_8 : f32 to vector<32x1xf32>
    %14 = arith.mulf %10, %13 : vector<32x1xf32>
    %15 = arith.mulf %12, %12 : vector<32x1xf32>
    %16 = arith.subf %14, %15 : vector<32x1xf32>
    %cst_9 = arith.constant 0.000000e+00 : f32
    %17 = vector.broadcast %cst_9 : f32 to vector<32x1xf32>
    %18 = arith.maximumf %16, %17 : vector<32x1xf32>
    %cst_10 = arith.constant 9.99999974E-6 : f32
    %19 = vector.broadcast %cst_10 : f32 to vector<32x1xf32>
    %20 = arith.addf %18, %19 : vector<32x1xf32>
    %21 = math.rsqrt %20 : vector<32x1xf32>
    %22 = vector.broadcast %12 : vector<32x1xf32> to vector<32x32xf32>
    %23 = arith.subf %5, %22 : vector<32x32xf32>
    %24 = vector.broadcast %21 : vector<32x1xf32> to vector<32x32xf32>
    %25 = arith.mulf %23, %24 : vector<32x32xf32>
    %c0_11 = arith.constant 0 : index
    %c0_12 = arith.constant 0 : index
    %26 = vector.load %arg4[%c0_11, %c0_12] : memref<1x32xf32, #tpu.memory_space<vmem>>, vector<1x32xf32>
    %27 = vector.broadcast %26 : vector<1x32xf32> to vector<32x32xf32>
    %28 = arith.mulf %25, %27 : vector<32x32xf32>
    %c0_13 = arith.constant 0 : index
    %c0_14 = arith.constant 0 : index
    %29 = vector.load %arg5[%c0_13, %c0_14] : memref<1x32xf32, #tpu.memory_space<vmem>>, vector<1x32xf32>
    %30 = vector.broadcast %29 : vector<1x32xf32> to vector<32x32xf32>
    %31 = arith.addf %28, %30 : vector<32x32xf32>
    %c0_15 = arith.constant 0 : index
    %c0_16 = arith.constant 0 : index
    %32 = vector.load %arg6[%c0_15, %c0_16] : memref<32x32xf32, #tpu.memory_space<vmem>>, vector<32x32xf32>
    tpu.vector_store %arg6[%c0_15, %c0_16], %31 {strides = array<i32>} : memref<32x32xf32, #tpu.memory_space<vmem>>, vector<32x32xf32>,
    return
  }
  func.func @transform_0(%arg0: i32) -> (i32, i32) {
    %c0_i32 = arith.constant 0 : i32
    %c0_i32_0 = arith.constant 0 : i32
    return %arg0, %c0_i32 : i32, i32
  }
  func.func @transform_1(%arg0: i32) -> (i32, i32) {
    %c0_i32 = arith.constant 0 : i32
    %c0_i32_0 = arith.constant 0 : i32
    %c0_i32_1 = arith.constant 0 : i32
    return %c0_i32, %c0_i32_0 : i32, i32
  }
  func.func @transform_2(%arg0: i32) -> (i32, i32) {
    %c0_i32 = arith.constant 0 : i32
    %c0_i32_0 = arith.constant 0 : i32
    %c0_i32_1 = arith.constant 0 : i32
    return %c0_i32, %c0_i32_0 : i32, i32
  }
  func.func @transform_3(%arg0: i32) -> (i32, i32) {
    %c0_i32 = arith.constant 0 : i32
    %c0_i32_0 = arith.constant 0 : i32
    %c0_i32_1 = arith.constant 0 : i32
    return %c0_i32, %c0_i32_0 : i32, i32
  }
  func.func @transform_4(%arg0: i32) -> (i32, i32) {
    %c0_i32 = arith.constant 0 : i32
    %c0_i32_0 = arith.constant 0 : i32
    %c0_i32_1 = arith.constant 0 : i32
    return %c0_i32, %c0_i32_0 : i32, i32
  }
  func.func @transform_5(%arg0: i32) -> (i32, i32) {
    %c0_i32 = arith.constant 0 : i32
    %c0_i32_0 = arith.constant 0 : i32
    return %arg0, %c0_i32 : i32, i32
  }
}

</mosaic_0001>

<llo_original>
// kernel: tpu_custom_call.1
$region0: #{tpu_custom_call.1}
  #allocation0 [shape = 'u32[]', space=smem, size = 0x4, offset = 0x4, fixed_abs, tag = 'smem constant byte address 0x4 - core index']
  #allocation1 [shape = 'u32[144,128]{1,0:T(1,128)}', space=vmem, size = 0x12000, scoped, tag = 'internal scratch']
  %s0 = inlined_call_operand.vmem [shape: f32[32,147], index: 0, kind: input, shape index: {}]
  %s1 = inlined_call_operand.vmem [shape: f32[147,32], index: 1, kind: input, shape index: {}]
  %s2 = inlined_call_operand.vmem [shape: f32[1,32], index: 2, kind: input, shape index: {}]
  %s3 = inlined_call_operand.vmem [shape: f32[1,32], index: 3, kind: input, shape index: {}]
  %s4 = inlined_call_operand.vmem [shape: f32[1,32], index: 4, kind: input, shape index: {}]
  %s5 = inlined_call_operand.hbm [shape: f32[32,32], index: 5, kind: output, shape index: {}]
  %s6 = sld [smem:[#allocation0]]
  $region30: #{tpu_custom_call.1} parent=0
    _
  %s8 = ssub.s32 1, %s6
  %s9 = scalar_select 0, %s8, %s6
  $region1: #{tpu_custom_call.1} parent=0
    #allocation2 [shape = 'u8[16384]{0}', space=vmem, size = 0x4000, scoped, tag = 'output window, operand 0, single buffered']
    #allocation3 [shape = 's32[1]{0}', space=sflag, size = 0x4, scoped, tag = 'scoped memory for tpu_custom_call.1']
    %10 = vsyncpa [#allocation3], 0
    // Predicated region
    $region2: #{tpu_custom_call.1} parent=1 // pred_check
      _
    $region3: #{tpu_custom_call.1} parent=1 // pred_check_branch
      %12 = sbr.rel (0) target = $region5
    $region4: #{tpu_custom_call.1} parent=1 // pred_region
      _
    $region5: #{tpu_custom_call.1} parent=1 // pred_fallthru
      _
    // Predicated region
    $region6: #{tpu_custom_call.1} parent=1 // pred_check
      _
    $region7: #{tpu_custom_call.1} parent=1 // pred_check_branch
      %14 = sbr.rel (0) target = $region9
    $region8: #{tpu_custom_call.1} parent=1 // pred_region
      _
    $region9: #{tpu_custom_call.1} parent=1 // pred_fallthru
      _
    // Predicated region
    $region10: #{tpu_custom_call.1} parent=1 // pred_check
      _
    $region11: #{tpu_custom_call.1} parent=1 // pred_check_branch
      %16 = sbr.rel (0) target = $region13
    $region12: #{tpu_custom_call.1} parent=1 // pred_region
      _
    $region13: #{tpu_custom_call.1} parent=1 // pred_fallthru
      _
    // Predicated region
    $region14: #{tpu_custom_call.1} parent=1 // pred_check
      _
    $region15: #{tpu_custom_call.1} parent=1 // pred_check_branch
      %18 = sbr.rel (0) target = $region17
    $region16: #{tpu_custom_call.1} parent=1 // pred_region
      _
    $region17: #{tpu_custom_call.1} parent=1 // pred_fallthru
      _
    // Predicated region
    $region18: #{tpu_custom_call.1} parent=1 // pred_check
      _
    $region19: #{tpu_custom_call.1} parent=1 // pred_check_branch
      %20 = sbr.rel (0) target = $region21
    $region20: #{tpu_custom_call.1} parent=1 // pred_region
      _
    $region21: #{tpu_custom_call.1} parent=1 // pred_fallthru
      _
    %v21 = vld [vmem:[%s0] sm:$0xff]
    %v22 = vld [vmem:[%s0 + $0x8] sm:$0xff]
    %v23 = vld [vmem:[%s0 + $0x10] sm:$0xff]
    %v24 = vld [vmem:[%s0 + $0x18] sm:$0xff]
    %v25 = vld [vmem:[%s0 + $0x20] sm:$0xff]
    %v26 = vld [vmem:[%s0 + $0x28] sm:$0xff]
    %v27 = vld [vmem:[%s0 + $0x30] sm:$0xff]
    %v28 = vld [vmem:[%s0 + $0x38] sm:$0xff]
    %v29 = vld [vmem:[%s1] sm:$0xff]
    %v30 = vld [vmem:[%s1 + $0x8] sm:$0xff]
    %v31 = vld [vmem:[%s1 + $0x10] sm:$0xff]
    %v32 = vld [vmem:[%s1 + $0x18] sm:$0xff]
    %v33 = vld [vmem:[%s1 + $0x20] sm:$0xff]
    %v34 = vld [vmem:[%s1 + $0x28] sm:$0xff]
    %v35 = vld [vmem:[%s1 + $0x30] sm:$0xff]
    %v36 = vld [vmem:[%s1 + $0x38] sm:$0xff]
    %v37 = vld [vmem:[%s1 + $0x40] sm:$0xff]
    %v38 = vld [vmem:[%s1 + $0x48] sm:$0xff]
    %v39 = vld [vmem:[%s1 + $0x50] sm:$0xff]
    %v40 = vld [vmem:[%s1 + $0x58] sm:$0xff]
    %v41 = vld [vmem:[%s1 + $0x60] sm:$0xff]
    %v42 = vld [vmem:[%s1 + $0x68] sm:$0xff]
    %v43 = vld [vmem:[%s1 + $0x70] sm:$0xff]
    %v44 = vld [vmem:[%s1 + $0x78] sm:$0xff]
    %v45 = vld [vmem:[%s1 + $0x80] sm:$0xff]
    %v46 = vld [vmem:[%s1 + $0x88] sm:$0xff]
    %v47 = vld [vmem:[%s1 + $0x90] sm:$0x7]
    %v48 = vld [vmem:[%s2] sm:$0x1]
    %v50 = vlaneseq
    %v51 = vshrl.u32 %v50, 7
    %v52 = vsub.s32 0, %v51
    %v53 = vrot.slane %v48, %v52
    %vm55 = vcmask 154624
    %v57 = vsel %vm55, %v22, 0
    %v60 = vsel %vm55, %v24, 0
    %v63 = vsel %vm55, %v26, 0
    %v66 = vsel %vm55, %v28, 0
    %vm68 = vcmask 1042432
    %v70 = vsel %vm68, %v47, 0
    %72 = vmatprep.subr.mxu0 0.0
    %73 = vmatpush1.msra.mxu0 %v44
    %74 = vmatprep.subr.mxu0 0.0
    %75 = vmatpush1.msra.mxu0 %v43
    %76 = vmatprep.subr.mxu0 0.0
    %77 = vmatpush1.msra.mxu0 %v42
    %78 = vmatprep.subr.mxu0 0.0
    %79 = vmatpush1.msra.mxu0 %v41
    %80 = vmatprep.subr.mxu0 0.0
    %81 = vmatpush1.msra.mxu0 %v40
    %82 = vmatprep.subr.mxu0 0.0
    %83 = vmatpush1.msra.mxu0 %v39
    %84 = vmatprep.subr.mxu0 0.0
    %85 = vmatpush1.msra.mxu0 %v38
    %86 = vmatprep.subr.mxu0 0.0
    %87 = vmatpush1.msra.mxu0 %v37
    %88 = vmatprep.subr.mxu0 0.0
    %89 = vmatpush1.msra.mxu0 %v36
    %90 = vmatprep.subr.mxu0 0.0
    %91 = vmatpush1.msra.mxu0 %v35
    %92 = vmatprep.subr.mxu0 0.0
    %93 = vmatpush1.msra.mxu0 %v34
    %94 = vmatprep.subr.mxu0 0.0
    %95 = vmatpush1.msra.mxu0 %v33
    %96 = vmatprep.subr.mxu0 0.0
    %97 = vmatpush1.msra.mxu0 %v32
    %98 = vmatprep.subr.mxu0 0.0
    %99 = vmatpush1.msra.mxu0 %v31
    %100 = vmatprep.subr.mxu0 0.0
    %101 = vmatpush1.msra.mxu0 %v30
    %102 = vmatprep.subr.mxu0 0.0
    %103 = vmatpush1.msra.mxu0 %v29
    %104 = vmatprep.subr.mxu0 0.0
    %105 = vmatpush2.msra.mxu0 0.0
    %106 = vmatprep.subr.mxu0 0.0
    %107 = vmatpush2.msra.mxu0 0.0
    %108 = vmatprep.subr.mxu0 0.0
    %109 = vmatpush2.msra.mxu0 0.0
    %110 = vmatprep.subr.mxu0 0.0
    %111 = vmatpush2.msra.mxu0 0.0
    %112 = vmatprep.subr.mxu0 0.0
    %113 = vmatpush2.msra.mxu0 0.0
    %114 = vmatprep.subr.mxu0 0.0
    %115 = vmatpush2.msra.mxu0 0.0
    %116 = vmatprep.subr.mxu0 0.0
    %117 = vmatpush2.msra.mxu0 0.0
    %118 = vmatprep.subr.mxu0 0.0
    %119 = vmatpush2.msra.mxu0 0.0
    %120 = vmatprep.subr.mxu0 0.0
    %121 = vmatpush2.msra.mxu0 0.0
    %122 = vmatprep.subr.mxu0 0.0
    %123 = vmatpush2.msra.mxu0 0.0
    %124 = vmatprep.subr.mxu0 0.0
    %125 = vmatpush2.msra.mxu0 0.0
    %126 = vmatprep.subr.mxu0 0.0
    %127 = vmatpush2.msra.mxu0 0.0
    %128 = vmatprep.subr.mxu0 0.0
    %129 = vmatpush2.msra.mxu0 0.0
    %130 = vmatprep.subr.mxu0 0.0
    %131 = vmatpush2.msra.mxu0 %v70
    %132 = vmatprep.subr.mxu0 0.0
    %133 = vmatpush2.msra.mxu0 %v46
    %134 = vmatprep.subr.mxu0 0.0
    %135 = vmatpush2.msra.mxu0 %v45
    %136 = vmatprep.mubr.f32.mxu0 %v57
    %137 = vmatmul.mubr.f32.gmra.mxu0 %v21
    %v138 = vpop.f32.mrf.mxu0
    %v139 = vadd.f32 %v53, %v138
    %v140 = vpop.f32.mrf.mxu0
    %141 = vmatprep.mubr.f32.mxu0 %v60
    %142 = vmatmul.mubr.f32.gmra.mxu0 %v23
    %v143 = vpop.f32.mrf.mxu0
    %v144 = vadd.f32 %v53, %v143
    %v145 = vpop.f32.mrf.mxu0
    %146 = vmatprep.mubr.f32.mxu0 %v63
    %147 = vmatmul.mubr.f32.gmra.mxu0 %v25
    %v148 = vpop.f32.mrf.mxu0
    %v149 = vadd.f32 %v53, %v148
    %v150 = vpop.f32.mrf.mxu0
    %151 = vmatprep.mubr.f32.mxu0 %v66
    %152 = vmatmul.mubr.f32.gmra.mxu0 %v27
    %v153 = vpop.f32.mrf.mxu0
    %v154 = vadd.f32 %v53, %v153
    %v155 = vpop.f32.mrf.mxu0
    %156 = vdwg.mxu0
    %vm157 = vcmask 261120
    %v158 = vsel %vm157, %v139, 0.0
    %159 = vadd.xlane.f32.xlu0 %v158
    %v160 = vpop.xlane.xlu0 %159
    %v161 = vsel %vm157, %v144, 0.0
    %162 = vadd.xlane.f32.xlu0 %v161
    %v163 = vpop.xlane.xlu0 %162
    %v164 = vsel %vm157, %v149, 0.0
    %165 = vadd.xlane.f32.xlu0 %v164
    %v166 = vpop.xlane.xlu0 %165
    %v167 = vsel %vm157, %v154, 0.0
    %168 = vadd.xlane.f32.xlu0 %v167
    %v169 = vpop.xlane.xlu0 %168
    %v170 = vmul.f32 %v139, %v139
    %v171 = vmul.f32 %v144, %v144
    %v172 = vmul.f32 %v149, %v149
    %v173 = vmul.f32 %v154, %v154
    %v174 = vsel %vm157, %v170, 0.0
    %175 = vadd.xlane.f32.xlu0 %v174
    %v176 = vpop.xlane.xlu0 %175
    %v177 = vsel %vm157, %v171, 0.0
    %178 = vadd.xlane.f32.xlu0 %v177
    %v179 = vpop.xlane.xlu0 %178
    %v180 = vsel %vm157, %v172, 0.0
    %181 = vadd.xlane.f32.xlu0 %v180
    %v182 = vpop.xlane.xlu0 %181
    %v183 = vsel %vm157, %v173, 0.0
    %184 = vadd.xlane.f32.xlu0 %v183
    %v185 = vpop.xlane.xlu0 %184
    %v186 = vmul.f32 %v160, 0.03125
    %v187 = vmul.f32 %v163, 0.03125
    %v188 = vmul.f32 %v166, 0.03125
    %v189 = vmul.f32 %v169, 0.03125
    %v190 = vmul.f32 %v176, 0.03125
    %v191 = vmul.f32 %v179, 0.03125
    %v192 = vmul.f32 %v182, 0.03125
    %v193 = vmul.f32 %v185, 0.03125
    %v194 = vmul.f32 %v186, %v186
    %v195 = vmul.f32 %v187, %v187
    %v196 = vmul.f32 %v188, %v188
    %v197 = vmul.f32 %v189, %v189
    %v198 = vsub.f32 %v190, %v194
    %v199 = vsub.f32 %v191, %v195
    %v200 = vsub.f32 %v192, %v196
    %v201 = vsub.f32 %v193, %v197
    %v202 = vmax.f32 %v198, 0.0
    %v203 = vmax.f32 %v199, 0.0
    %v204 = vmax.f32 %v200, 0.0
    %v205 = vmax.f32 %v201, 0.0
    %v206 = vadd.f32 %v202, 1e-05
    %v207 = vadd.f32 %v203, 1e-05
    %v208 = vadd.f32 %v204, 1e-05
    %v209 = vadd.f32 %v205, 1e-05
    %v210 = vrsqrt.pop %v206
    %v211 = vrsqrt.pop %v207
    %v212 = vrsqrt.pop %v208
    %v213 = vrsqrt.pop %v209
    %v214 = vsub.f32 %v139, %v186
    %v215 = vsub.f32 %v144, %v187
    %v216 = vsub.f32 %v149, %v188
    %v217 = vsub.f32 %v154, %v189
    %v218 = vmul.f32 %v214, %v210
    %v219 = vmul.f32 %v215, %v211
    %v220 = vmul.f32 %v216, %v212
    %v221 = vmul.f32 %v217, %v213
    %v222 = vld [vmem:[%s3] sm:$0x1]
    %v224 = vlaneseq
    %v225 = vshrl.u32 %v224, 7
    %v226 = vsub.s32 0, %v225
    %v227 = vrot.slane %v222, %v226
    %v229 = vmul.f32 %v218, %v227
    %v230 = vmul.f32 %v219, %v227
    %v231 = vmul.f32 %v220, %v227
    %v232 = vmul.f32 %v221, %v227
    %v233 = vld [vmem:[%s4] sm:$0x1]
    %v235 = vlaneseq
    %v236 = vshrl.u32 %v235, 7
    %v237 = vsub.s32 0, %v236
    %v238 = vrot.slane %v233, %v237
    %v240 = vadd.f32 %v229, %v238
    %v241 = vadd.f32 %v230, %v238
    %v242 = vadd.f32 %v231, %v238
    %v243 = vadd.f32 %v232, %v238
    %244 = vst.msk [vmem:[#allocation2] sm:$0xff] %vm157, %v240
    %245 = vst.msk [vmem:[#allocation2 + $0x8] sm:$0xff] %vm157, %v241
    %246 = vst.msk [vmem:[#allocation2 + $0x10] sm:$0xff] %vm157, %v242
    %247 = vst.msk [vmem:[#allocation2 + $0x18] sm:$0xff] %vm157, %v243
    // Predicated region
    $region22: #{tpu_custom_call.1} parent=1 // pred_check
      _
    $region23: #{tpu_custom_call.1} parent=1 // pred_check_branch
      %249 = sbr.rel (0) target = $region25
    $region24: #{tpu_custom_call.1} parent=1 // pred_region
      %s251 = ssub.s32 512, 512
      %252 = vsyncadd [#allocation3], %s251
      %s253 = sshll.u32 [#allocation2], 4
      %s254 = int_to_ptr.vmem [resolvable:$true] %s253
      %259 = dma.vmem_to_hbm [thread:$0]  %s254, 512, %s5, [#allocation3], 128, 128, 8
    $region25: #{tpu_custom_call.1} parent=1 // pred_fallthru
      _
    // Predicated region
    $region26: #{tpu_custom_call.1} parent=1 // pred_check
      _
    $region27: #{tpu_custom_call.1} parent=1 // pred_check_branch
      %261 = sbr.rel (0) target = $region29
    $region28: #{tpu_custom_call.1} parent=1 // pred_region
      %262 = dma.done [#allocation3], 512
    $region29: #{tpu_custom_call.1} parent=1 // pred_fallthru
      _
    %263 = vsyncpa [#allocation3], 1

</llo_original>
